<compile_context>
chip_gen: v7x
topology: tpu7x:2x2x1
jax: 0.10.0
libtpu: 0.0.40
codegen_flags: <defaults>
</compile_context>

<pallas_src>
import math

import jax
import jax.numpy as jnp
from jax.experimental import pallas as pl
from jax.experimental.pallas import tpu as pltpu


# ----------------------------------------------------------------------------
# upfirdn2d (used to 2x-upsample `skip`) — plain-JAX glue, mirrors the native
# PyTorch reference (zero-stuff -> pad -> conv with flipped kernel -> stride).
# TODO(synk): upfirdn2d runs as XLA glue (lax.conv), not inside the Pallas kernel.
# ----------------------------------------------------------------------------
def make_resample_kernel(k, factor=2):
    k = jnp.asarray(k, dtype=jnp.float32)
    k2 = jnp.outer(k, k)
    k2 = k2 / jnp.sum(k2)
    return k2 * (factor ** 2)


def upfirdn2d_jax(x, kernel, up, down, pad):
    b, c, in_h, in_w = x.shape
    kh, kw = kernel.shape
    p0, p1 = pad
    # zero-insertion upsample
    out = x.reshape(b * c, in_h, 1, in_w, 1)
    out = jnp.pad(out, ((0, 0), (0, 0), (0, up - 1), (0, 0), (0, up - 1)))
    out = out.reshape(b * c, 1, in_h * up, in_w * up)
    # pad (crop if negative)
    out = jnp.pad(out, ((0, 0), (0, 0),
                        (max(p0, 0), max(p1, 0)),
                        (max(p0, 0), max(p1, 0))))
    out = out[:, :,
              max(-p0, 0):out.shape[2] - max(-p1, 0),
              max(-p0, 0):out.shape[3] - max(-p1, 0)]
    # FIR filter (true convolution == cross-correlation with flipped kernel)
    w = jnp.flip(kernel, (0, 1)).reshape(1, 1, kh, kw)
    out = jax.lax.conv_general_dilated(
        out, w, window_strides=(down, down), padding="VALID",
        dimension_numbers=("NCHW", "OIHW", "NCHW"))
    out_h = (in_h * up + p0 + p1 - kh) // down + 1
    out_w = (in_w * up + p0 + p1 - kw) // down + 1
    return out.reshape(b, c, out_h, out_w)


# ----------------------------------------------------------------------------
# Pallas kernels: (3,C) x (C,T) matmul + fused bias (+ skip) add
# ----------------------------------------------------------------------------
def _torgb_kernel_skip(wmod_ref, x_ref, skip_ref, bias_ref, o_ref):
    # wmod: (1,3,C)  x: (1,C,T)  skip: (1,3,T)  bias: (3,1) f32  o: (1,3,T)
    out = jnp.dot(wmod_ref[0], x_ref[0], preferred_element_type=jnp.float32)
    o_ref[0] = (out + bias_ref[...]
                + skip_ref[0].astype(jnp.float32)).astype(o_ref.dtype)


def _torgb_kernel_noskip(wmod_ref, x_ref, bias_ref, o_ref):
    # bias: (3,1) broadcast over the pixel tile
    out = jnp.dot(wmod_ref[0], x_ref[0], preferred_element_type=jnp.float32)
    o_ref[0] = (out + bias_ref[...]).astype(o_ref.dtype)


def _pick_pixel_tile(hw, c, x_isize, skip_isize, out_isize, max_tile=4096):
    """Largest pixel tile T (multiple of 128, dividing HW) whose double-buffered
    per-column working set fits comfortably under the default scoped VMEM."""
    if hw % 128 != 0:
        return hw                      # full-block fallback (tiny layers, e.g. 4x4)
    budget = 12 * 1024 * 1024          # headroom under 16 MiB (v5e); fine on v6e/v7x
    per_lane = 2 * (c * x_isize + 3 * skip_isize + 3 * out_isize)  # double-buffered
    best = 128
    cand = 128
    while cand <= min(hw, max_tile):
        if hw % cand == 0 and cand * per_lane <= budget:
            best = cand
        cand *= 2
    return best


def to_rgb_pallas(x, style, params, skip=None, upsample=True, max_tile=4096):
    """ToRGB forward.

    x: (B,C,H,W) (f32 or bf16), style: (B,S), skip: (B,3,H//2,W//2) | None.
    The matmul runs in x.dtype with an f32 accumulator; output keeps x.dtype.
    """
    B, C, H, W = x.shape
    S = style.shape[1]
    HW = H * W
    out_dtype = x.dtype
    cdt = jnp.dtype(x.dtype)

    lin_scale = 1.0 / math.sqrt(S)        # EqualLinear scale (lr_mul=1)
    conv_scale = 1.0 / math.sqrt(C * 1)   # ModulatedConv2d scale (kernel_size=1)

    # ---- hoisted modulation (O(B*3*C), outside the kernel) -------------------
    s_mod = (style.astype(jnp.float32)
             @ (params["lin_weight"].astype(jnp.float32) * lin_scale).T
             + params["lin_bias"].astype(jnp.float32))                 # (B, C)
    w_mod = (conv_scale
             * params["conv_weight"].astype(jnp.float32)[None, :, :]
             * s_mod[:, None, :])                                      # (B, 3, C)
    w_mod = w_mod.astype(cdt)

    x_flat = x.reshape(B, C, HW)
    rgb_b = params["rgb_bias"].astype(jnp.float32).reshape(3, 1)

    cparams = pltpu.CompilerParams(dimension_semantics=("parallel", "parallel"))

    if skip is not None:
        if upsample:
            rk = make_resample_kernel((1, 3, 3, 1), factor=2)
            # UpFirDnUpsample(factor=2): pad = (2, 1)
            skip = upfirdn2d_jax(skip, rk, up=2, down=1, pad=(2, 1))
        skip_flat = skip.reshape(B, 3, HW)
        T = _pick_pixel_tile(HW, C, cdt.itemsize,
                             jnp.dtype(skip_flat.dtype).itemsize,
                             jnp.dtype(out_dtype).itemsize, max_tile)
        grid = (B, HW // T)
        out_flat = pl.pallas_call(
            _torgb_kernel_skip,
            out_shape=jax.ShapeDtypeStruct((B, 3, HW), out_dtype),
            grid=grid,
            in_specs=[
                pl.BlockSpec((1, 3, C), lambda b, t: (b, 0, 0)),   # modulated weight
                pl.BlockSpec((1, C, T), lambda b, t: (b, 0, t)),   # x pixel tile
                pl.BlockSpec((1, 3, T), lambda b, t: (b, 0, t)),   # upsampled skip tile
                pl.BlockSpec((3, 1), lambda b, t: (0, 0)),         # rgb bias
            ],
            out_specs=pl.BlockSpec((1, 3, T), lambda b, t: (b, 0, t)),
            compiler_params=cparams,
        )(w_mod, x_flat, skip_flat, rgb_b)
    else:
        T = _pick_pixel_tile(HW, C, cdt.itemsize, 0,
                             jnp.dtype(out_dtype).itemsize, max_tile)
        grid = (B, HW // T)
        out_flat = pl.pallas_call(
            _torgb_kernel_noskip,
            out_shape=jax.ShapeDtypeStruct((B, 3, HW), out_dtype),
            grid=grid,
            in_specs=[
                pl.BlockSpec((1, 3, C), lambda b, t: (b, 0, 0)),
                pl.BlockSpec((1, C, T), lambda b, t: (b, 0, t)),
                pl.BlockSpec((3, 1), lambda b, t: (0, 0)),
            ],
            out_specs=pl.BlockSpec((1, 3, T), lambda b, t: (b, 0, t)),
            compiler_params=cparams,
        )(w_mod, x_flat, rgb_b)

    return out_flat.reshape(B, 3, H, W)


# ----------------------------------------------------------------------------
# Pure-JAX reference for self-validation
# ----------------------------------------------------------------------------
def to_rgb_ref(x, style, params, skip=None, upsample=True):
    B, C, H, W = x.shape
    S = style.shape[1]
    lin_scale = 1.0 / math.sqrt(S)
    conv_scale = 1.0 / math.sqrt(C)
    s_mod = style @ (params["lin_weight"] * lin_scale).T + params["lin_bias"]  # (B, C)
    weight = conv_scale * params["conv_weight"][None] * s_mod[:, None, :]      # (B,3,C)
    out = jnp.einsum("boc,bchw->bohw", weight, x)
    out = out + params["rgb_bias"].reshape(1, 3, 1, 1)
    if skip is not None:
        if upsample:
            rk = make_resample_kernel((1, 3, 3, 1), factor=2)
            skip = upfirdn2d_jax(skip, rk, up=2, down=1, pad=(2, 1))
        out = out + skip
    return out


if __name__ == "__main__":
    key = jax.random.PRNGKey(0)
    B, C, S, H, W = 2, 8, 16, 32, 32
    k1, k2, k3, k4, k5 = jax.random.split(key, 5)

    x = jax.random.normal(k1, (B, C, H, W), dtype=jnp.float32)
    style = jax.random.normal(k2, (B, S), dtype=jnp.float32)
    skip = jax.random.normal(k3, (B, 3, H // 2, W // 2), dtype=jnp.float32)

    # Deterministic synthetic parameters (same shapes as ToRGB.__init__).
    params = {
        "lin_weight": jax.random.normal(k4, (C, S), dtype=jnp.float32),   # randn / lr_mul
        "lin_bias": jnp.ones((C,), dtype=jnp.float32),                    # bias_init_val=1
        "conv_weight": jax.random.normal(k5, (3, C), dtype=jnp.float32),  # (1,3,C,1,1) squeezed
        "rgb_bias": jnp.zeros((3,), dtype=jnp.float32),                   # zeros(1,3,1,1)
    }

    ref = to_rgb_ref(x, style, params, skip=skip)

    # 1) skip path, f32, small pixel tile -> exercises the 2-D (B, HW/T) grid.
    out = jax.block_until_ready(
        to_rgb_pallas(x, style, params, skip=skip, max_tile=256))
    assert out.shape == (B, 3, H, W), out.shape
    assert jnp.allclose(out, ref, atol=1e-4, rtol=1e-4), \
        float(jnp.max(jnp.abs(out - ref)))

    # 2) skip path, default (single-tile-per-batch) tiling.
    out2 = jax.block_until_ready(to_rgb_pallas(x, style, params, skip=skip))
    assert jnp.allclose(out2, ref, atol=1e-4, rtol=1e-4)

    # 3) no-skip path (dedicated kernel, no zero-skip DMA).
    ref_ns = to_rgb_ref(x, style, params, skip=None)
    out_ns = jax.block_until_ready(to_rgb_pallas(x, style, params, skip=None))
    assert jnp.allclose(out_ns, ref_ns, atol=1e-4, rtol=1e-4)

    # 4) tiny-layer fallback (HW not a multiple of 128).
    xs = jax.random.normal(k1, (B, C, 4, 4), dtype=jnp.float32)
    ss = jax.random.normal(k3, (B, 3, 2, 2), dtype=jnp.float32)
    ref_sm = to_rgb_ref(xs, style, params, skip=ss)
    out_sm = jax.block_until_ready(to_rgb_pallas(xs, style, params, skip=ss))
    assert jnp.allclose(out_sm, ref_sm, atol=1e-4, rtol=1e-4)

    # 5) bf16 x (halves the dominant HBM read traffic); looser tolerance.
    out_bf = jax.block_until_ready(
        to_rgb_pallas(x.astype(jnp.bfloat16), style, params,
                      skip=skip, max_tile=256))
    assert out_bf.dtype == jnp.bfloat16
    assert jnp.allclose(out_bf.astype(jnp.float32), ref, atol=2.5e-1, rtol=5e-2)

    print("KERNEL_OK")
</pallas_src>

<mosaic_0001>
module attributes {stable_mosaic.version = 11 : i64} {
  func.func @_torgb_kernel_skip(%arg0: i32, %arg1: i32, %arg2: memref<1x3x8xf32, #tpu.memory_space<vmem>>, %arg3: memref<1x8x256xf32, #tpu.memory_space<vmem>>, %arg4: memref<1x3x256xf32, #tpu.memory_space<vmem>>, %arg5: memref<3x1xf32, #tpu.memory_space<vmem>>, %arg6: memref<1x3x256xf32, #tpu.memory_space<vmem>>) attributes {dimension_semantics = [#tpu.dimension_semantics<parallel>, #tpu.dimension_semantics<parallel>], iteration_bounds = array<i64: 2, 4>, scalar_prefetch = 0 : i64, scratch_operands = 0 : i64, tpu.core_type = #tpu.core_type<tc>, window_params = [{transform_indices = @transform_0, window_bounds = array<i64: 1, 3, 8>}, {transform_indices = @transform_1, window_bounds = array<i64: 1, 8, 256>}, {transform_indices = @transform_2, window_bounds = array<i64: 1, 3, 256>}, {pipeline_mode = #tpu.pipeline_mode<synchronous>, transform_indices = @transform_3, window_bounds = array<i64: 3, 1>}, {transform_indices = @transform_4, window_bounds = array<i64: 1, 3, 256>}]} {
    %c0 = arith.constant 0 : index
    %c0_0 = arith.constant 0 : index
    %c0_1 = arith.constant 0 : index
    %0 = vector.load %arg2[%c0, %c0_0, %c0_1] : memref<1x3x8xf32, #tpu.memory_space<vmem>>, vector<1x3x8xf32>
    %1 = vector.shape_cast %0 : vector<1x3x8xf32> to vector<3x8xf32>
    %c0_2 = arith.constant 0 : index
    %c0_3 = arith.constant 0 : index
    %c0_4 = arith.constant 0 : index
    %2 = vector.load %arg3[%c0_2, %c0_3, %c0_4] : memref<1x8x256xf32, #tpu.memory_space<vmem>>, vector<1x8x256xf32>
    %3 = vector.shape_cast %2 : vector<1x8x256xf32> to vector<8x256xf32>
    %cst = arith.constant dense<0.000000e+00> : vector<3x256xf32>
    %4 = tpu.matmul %1, %3, %cst {dimension_numbers = #tpu.dot_dimension_numbers<[1], [0], [0], [1], [0, 0, 1, 1], [], []>} : vector<3x8xf32>, vector<8x256xf32>, vector<3x256xf32> -> vector<3x256xf32>
    %c0_5 = arith.constant 0 : index
    %c0_6 = arith.constant 0 : index
    %5 = vector.load %arg5[%c0_5, %c0_6] : memref<3x1xf32, #tpu.memory_space<vmem>>, vector<3x1xf32>
    %6 = vector.broadcast %5 : vector<3x1xf32> to vector<3x256xf32>
    %7 = arith.addf %4, %6 : vector<3x256xf32>
    %c0_7 = arith.constant 0 : index
    %c0_8 = arith.constant 0 : index
    %c0_9 = arith.constant 0 : index
    %8 = vector.load %arg4[%c0_7, %c0_8, %c0_9] : memref<1x3x256xf32, #tpu.memory_space<vmem>>, vector<1x3x256xf32>
    %9 = vector.shape_cast %8 : vector<1x3x256xf32> to vector<3x256xf32>
    %10 = arith.addf %7, %9 : vector<3x256xf32>
    %c0_10 = arith.constant 0 : index
    %c0_11 = arith.constant 0 : index
    %c0_12 = arith.constant 0 : index
    %11 = vector.load %arg6[%c0_10, %c0_11, %c0_12] : memref<1x3x256xf32, #tpu.memory_space<vmem>>, vector<1x3x256xf32>
    %12 = vector.shape_cast %11 : vector<1x3x256xf32> to vector<3x256xf32>
    %13 = vector.shape_cast %10 : vector<3x256xf32> to vector<1x3x256xf32>
    tpu.vector_store %arg6[%c0_10, %c0_11, %c0_12], %13 {strides = array<i32>} : memref<1x3x256xf32, #tpu.memory_space<vmem>>, vector<1x3x256xf32>,
    return
  }
  func.func @transform_0(%arg0: i32, %arg1: i32) -> (i32, i32, i32) {
    %c0_i32 = arith.constant 0 : i32
    %c0_i32_0 = arith.constant 0 : i32
    %c0_i32_1 = arith.constant 0 : i32
    return %arg0, %c0_i32, %c0_i32_0 : i32, i32, i32
  }
  func.func @transform_1(%arg0: i32, %arg1: i32) -> (i32, i32, i32) {
    %c0_i32 = arith.constant 0 : i32
    %c0_i32_0 = arith.constant 0 : i32
    return %arg0, %c0_i32, %arg1 : i32, i32, i32
  }
  func.func @transform_2(%arg0: i32, %arg1: i32) -> (i32, i32, i32) {
    %c0_i32 = arith.constant 0 : i32
    %c0_i32_0 = arith.constant 0 : i32
    return %arg0, %c0_i32, %arg1 : i32, i32, i32
  }
  func.func @transform_3(%arg0: i32, %arg1: i32) -> (i32, i32) {
    %c0_i32 = arith.constant 0 : i32
    %c0_i32_0 = arith.constant 0 : i32
    %c0_i32_1 = arith.constant 0 : i32
    return %c0_i32, %c0_i32_0 : i32, i32
  }
  func.func @transform_4(%arg0: i32, %arg1: i32) -> (i32, i32, i32) {
    %c0_i32 = arith.constant 0 : i32
    %c0_i32_0 = arith.constant 0 : i32
    return %arg0, %c0_i32, %arg1 : i32, i32, i32
  }
}

</mosaic_0001>

<llo_original>
// kernel: tpu_custom_call.1
$region0: #{tpu_custom_call.1}
  #allocation0 [shape = 'u32[]', space=smem, size = 0x4, offset = 0x4, fixed_abs, tag = 'smem constant byte address 0x4 - core index']
  #allocation1 [shape = 'u32[144,128]{1,0:T(1,128)}', space=vmem, size = 0x12000, scoped, tag = 'internal scratch']
  %s0 = inlined_call_operand.vmem [shape: f32[2,3,8], index: 0, kind: input, shape index: {}]
  %s1 = inlined_call_operand.vmem [shape: f32[2,8,1024], index: 1, kind: input, shape index: {}]
  %s2 = inlined_call_operand.vmem [shape: f32[2,3,1024], index: 2, kind: input, shape index: {}]
  %s3 = inlined_call_operand.vmem [shape: f32[3,1], index: 3, kind: input, shape index: {}]
  %s4 = inlined_call_operand.vmem [shape: f32[2,3,1024], index: 4, kind: output, shape index: {}]
  %s5 = sld [smem:[#allocation0]]
  $region49: #{tpu_custom_call.1} parent=0
    _
  %s7 = ssub.s32 1, %s5
  %s8 = scalar_select 0, %s7, %s5
  loop: start=0, step=1, limit=10
  $region2: #{tpu_custom_call.1} parent=0 // loop_pre_header
    _
  $region3: #{tpu_custom_call.1} parent=0 // loop_header
    %s10 = sphi 0, %s14
    %p11 = scmp.ge.s32.totalorder %s10, 10
    %s17 = sphi 0, %s29
    %s18 = sphi 0, %s25
    %s19 = sphi 0, %s17
    %s20 = sphi 0, %s18
    %s21 = sphi 0, %s19
    %s22 = sphi 0, %s20
    %s32 = sphi 0, %s34
    %s35 = sphi 0, %s32
    %s36 = sphi 0, %s35
    %s52 = sphi 0, %s36
    %s60 = sphi 0, %s62
    %s63 = sphi 0, %s60
    %s64 = sphi 0, %s63
    %s80 = sphi 0, %s64
    %s88 = sphi 0, %s90
    %s91 = sphi 0, %s88
    %s92 = sphi 0, %s91
    %s108 = sphi 0, %s92
    %s112 = sphi 0, %s112
    %s114 = sphi 0, %s112
    %s115 = sphi 0, %s114
    %s129 = sphi 0, %s115
    %s137 = sphi 0, %s139
    %s140 = sphi 0, %s137
    %s141 = sphi 0, %s140
    %s157 = sphi 0, %s141
  $region4: #{tpu_custom_call.1} parent=0 // loop_header_branch
    %13 = sbr.rel (%p11) target = $region8
  $region5: #{tpu_custom_call.1} parent=0 // loop_body
    %s15 = ssub.s32 %s10, 1
    %s16 = ssub.s32 %s10, 2
    %s23 = sadd.s32 1, %s18
    %p24 = scmp.ge.s32.totalorder %s23, 4
    %s25 = scalar_select %p24, 0, %s23
    %s26 = sadd.s32 1, %s17
    %s27 = scalar_select %p24, %s26, %s17
    %p28 = scmp.ge.s32.totalorder %s27, 2
    %s29 = scalar_select %p28, 0, %s27
    %s30 = ssub.s32 %s17, %s29
    %p31 = scmp.eq.s32.totalorder %s30, 0
    %s33 = sadd.s32 %s32, 1
    %s34 = scalar_select %p31, %s32, %s33
    %p37 = pneg %p31
    %p38 = scmp.eq.s32.totalorder %s10, 7
    %p39 = por %p37, %p38
    %p40 = scmp.ne.s32.totalorder %s32, %s35
    %p41 = scmp.eq.s32.totalorder %s10, 0
    %p42 = por %p40, %p41
    %p43 = scmp.ne.s32.totalorder %s32, %s35
    %p44 = scmp.eq.s32.totalorder %s15, 7
    %p45 = por %p43, %p44
    %p46 = scmp.ne.s32.totalorder %s35, %s36
    %p47 = scmp.eq.s32.totalorder %s15, 0
    %p48 = por %p46, %p47
    %p49 = scmp.ne.s32.totalorder %s35, %s36
    %p50 = scmp.eq.s32.totalorder %s16, 7
    %p51 = por %p49, %p50
    %p53 = scmp.ne.s32.totalorder %s36, %s52
    %p54 = scmp.eq.s32.totalorder %s16, 0
    %p55 = por %p53, %p54
    %s56 = ssub.s32 %s17, %s29
    %s57 = ssub.s32 %s18, %s25
    %s58 = sor.u32 %s56, %s57
    %p59 = scmp.eq.s32.totalorder %s58, 0
    %s61 = sadd.s32 %s60, 1
    %s62 = scalar_select %p59, %s60, %s61
    %p65 = pneg %p59
    %p66 = scmp.eq.s32.totalorder %s10, 7
    %p67 = por %p65, %p66
    %p68 = scmp.ne.s32.totalorder %s60, %s63
    %p69 = scmp.eq.s32.totalorder %s10, 0
    %p70 = por %p68, %p69
    %p71 = scmp.ne.s32.totalorder %s60, %s63
    %p72 = scmp.eq.s32.totalorder %s15, 7
    %p73 = por %p71, %p72
    %p74 = scmp.ne.s32.totalorder %s63, %s64
    %p75 = scmp.eq.s32.totalorder %s15, 0
    %p76 = por %p74, %p75
    %p77 = scmp.ne.s32.totalorder %s63, %s64
    %p78 = scmp.eq.s32.totalorder %s16, 7
    %p79 = por %p77, %p78
    %p81 = scmp.ne.s32.totalorder %s64, %s80
    %p82 = scmp.eq.s32.totalorder %s16, 0
    %p83 = por %p81, %p82
    %s84 = ssub.s32 %s17, %s29
    %s85 = ssub.s32 %s18, %s25
    %s86 = sor.u32 %s84, %s85
    %p87 = scmp.eq.s32.totalorder %s86, 0
    %s89 = sadd.s32 %s88, 1
    %s90 = scalar_select %p87, %s88, %s89
    %p93 = pneg %p87
    %p94 = scmp.eq.s32.totalorder %s10, 7
    %p95 = por %p93, %p94
    %p96 = scmp.ne.s32.totalorder %s88, %s91
    %p97 = scmp.eq.s32.totalorder %s10, 0
    %p98 = por %p96, %p97
    %p99 = scmp.ne.s32.totalorder %s88, %s91
    %p100 = scmp.eq.s32.totalorder %s15, 7
    %p101 = por %p99, %p100
    %p102 = scmp.ne.s32.totalorder %s91, %s92
    %p103 = scmp.eq.s32.totalorder %s15, 0
    %p104 = por %p102, %p103
    %p105 = scmp.ne.s32.totalorder %s91, %s92
    %p106 = scmp.eq.s32.totalorder %s16, 7
    %p107 = por %p105, %p106
    %p109 = scmp.ne.s32.totalorder %s92, %s108
    %p110 = scmp.eq.s32.totalorder %s16, 0
    %p111 = por %p109, %p110
    %s113 = sadd.s32 %s112, 1
    %p116 = scmp.eq.s32.totalorder %s10, 7
    %p117 = scmp.ne.s32.totalorder %s112, %s114
    %p118 = scmp.eq.s32.totalorder %s10, 0
    %p119 = por %p117, %p118
    %p120 = scmp.ne.s32.totalorder %s112, %s114
    %p121 = scmp.eq.s32.totalorder %s15, 7
    %p122 = por %p120, %p121
    %p123 = scmp.ne.s32.totalorder %s114, %s115
    %p124 = scmp.eq.s32.totalorder %s15, 0
    %p125 = por %p123, %p124
    %p126 = scmp.ne.s32.totalorder %s114, %s115
    %p127 = scmp.eq.s32.totalorder %s16, 7
    %p128 = por %p126, %p127
    %p130 = scmp.ne.s32.totalorder %s115, %s129
    %p131 = scmp.eq.s32.totalorder %s16, 0
    %p132 = por %p130, %p131
    %s133 = ssub.s32 %s17, %s29
    %s134 = ssub.s32 %s18, %s25
    %s135 = sor.u32 %s133, %s134
    %p136 = scmp.eq.s32.totalorder %s135, 0
    %s138 = sadd.s32 %s137, 1
    %s139 = scalar_select %p136, %s137, %s138
    %p142 = pneg %p136
    %p143 = scmp.eq.s32.totalorder %s10, 7
    %p144 = por %p142, %p143
    %p145 = scmp.ne.s32.totalorder %s137, %s140
    %p146 = scmp.eq.s32.totalorder %s10, 0
    %p147 = por %p145, %p146
    %p148 = scmp.ne.s32.totalorder %s137, %s140
    %p149 = scmp.eq.s32.totalorder %s15, 7
    %p150 = por %p148, %p149
    %p151 = scmp.ne.s32.totalorder %s140, %s141
    %p152 = scmp.eq.s32.totalorder %s15, 0
    %p153 = por %p151, %p152
    %p154 = scmp.ne.s32.totalorder %s140, %s141
    %p155 = scmp.eq.s32.totalorder %s16, 7
    %p156 = por %p154, %p155
    %p158 = scmp.ne.s32.totalorder %s141, %s157
    %p159 = scmp.eq.s32.totalorder %s16, 0
    %p160 = por %p158, %p159
    %p161 = scmp.le.s32.totalorder 1, %s10
    %p162 = scmp.lt.s32.totalorder %s10, 9
    %p163 = pnand %p161, %p162
    %p164 = pneg %p163
    // Predicated region
    $region9: #{tpu_custom_call.1} parent=5 // pred_check
      _
    $region10: #{tpu_custom_call.1} parent=5 // pred_check_branch
      %166 = sbr.rel (%p163) target = $region12
    $region11: #{tpu_custom_call.1} parent=5 // pred_region
      %s167 = ssub.s32 %s10, 1
      // Predicated region
      $region13: #{tpu_custom_call.1} parent=11 // pred_check
        %p168 = pneg %p125
      $region14: #{tpu_custom_call.1} parent=11 // pred_check_branch
        %170 = sbr.rel (%p168) target = $region16
      $region15: #{tpu_custom_call.1} parent=11 // pred_region
        _
      $region16: #{tpu_custom_call.1} parent=11 // pred_fallthru
        _
    $region12: #{tpu_custom_call.1} parent=5 // pred_fallthru
      _
    %p171 = scmp.lt.s32.totalorder %s10, 8
    // Predicated region
    $region17: #{tpu_custom_call.1} parent=5 // pred_check
      %p172 = pneg %p171
    $region18: #{tpu_custom_call.1} parent=5 // pred_check_branch
      %174 = sbr.rel (%p172) target = $region20
    $region19: #{tpu_custom_call.1} parent=5 // pred_region
      // Predicated region
      $region21: #{tpu_custom_call.1} parent=19 // pred_check
        %p175 = pneg %p42
      $region22: #{tpu_custom_call.1} parent=19 // pred_check_branch
        %177 = sbr.rel (%p175) target = $region24
      $region23: #{tpu_custom_call.1} parent=19 // pred_region
        %p178 = scmp.lt.s32.totalorder %s17, 1
        %s179 = scalar_select %p178, %s17, 1
        %s180 = smul.addr %s179, 4
        %s181 = scalar_lea.vmem %s0, %s180
      $region24: #{tpu_custom_call.1} parent=19 // pred_fallthru
        _
      // Predicated region
      $region25: #{tpu_custom_call.1} parent=19 // pred_check
        %p182 = pneg %p70
      $region26: #{tpu_custom_call.1} parent=19 // pred_check_branch
        %184 = sbr.rel (%p182) target = $region28
      $region27: #{tpu_custom_call.1} parent=19 // pred_region
        %s185 = smul.u32 2, %s18
        %p186 = scmp.lt.s32.totalorder %s17, 1
        %s187 = scalar_select %p186, %s17, 1
        %p188 = scmp.lt.s32.totalorder %s185, 7
        %s189 = scalar_select %p188, %s185, 7
        %s190 = smul.addr %s187, 8
        %s191 = sadd.s32 %s189, %s190
        %s192 = smul.addr %s191, 8
        %s193 = scalar_lea.vmem %s1, %s192
        %s194 = smul.u32 2, %s18
      $region28: #{tpu_custom_call.1} parent=19 // pred_fallthru
        _
      // Predicated region
      $region29: #{tpu_custom_call.1} parent=19 // pred_check
        %p195 = pneg %p98
      $region30: #{tpu_custom_call.1} parent=19 // pred_check_branch
        %197 = sbr.rel (%p195) target = $region32
      $region31: #{tpu_custom_call.1} parent=19 // pred_region
        %s198 = smul.u32 2, %s18
        %p199 = scmp.lt.s32.totalorder %s17, 1
        %s200 = scalar_select %p199, %s17, 1
        %p201 = scmp.lt.s32.totalorder %s198, 7
        %s202 = scalar_select %p201, %s198, 7
        %s203 = smul.addr %s200, 8
        %s204 = sadd.s32 %s202, %s203
        %s205 = smul.addr %s204, 4
        %s206 = scalar_lea.vmem %s2, %s205
        %s207 = smul.u32 2, %s18
      $region32: #{tpu_custom_call.1} parent=19 // pred_fallthru
        _
    $region20: #{tpu_custom_call.1} parent=5 // pred_fallthru
      _
    %p208 = scmp.le.s32.totalorder 1, %s10
    %p209 = scmp.lt.s32.totalorder %s10, 9
    %p210 = pnand %p208, %p209
    %p211 = pneg %p210
    // Predicated region
    $region33: #{tpu_custom_call.1} parent=5 // pred_check
      _
    $region34: #{tpu_custom_call.1} parent=5 // pred_check_branch
      %213 = sbr.rel (%p210) target = $region36
    $region35: #{tpu_custom_call.1} parent=5 // pred_region
      %s214 = ssub.s32 %s10, 1
      %p215 = scmp.lt.s32.totalorder %s19, 1
      %s216 = scalar_select %p215, %s19, 1
      %s217 = smul.addr %s216, 4
      %s218 = scalar_lea.vmem %s0, %s217
      %p219 = pneg %p48
      %p220 = pneg %p45
      %s221 = smul.u32 2, %s20
      %p222 = scmp.lt.s32.totalorder %s19, 1
      %s223 = scalar_select %p222, %s19, 1
      %p224 = scmp.lt.s32.totalorder %s221, 7
      %s225 = scalar_select %p224, %s221, 7
      %s226 = smul.addr %s223, 8
      %s227 = sadd.s32 %s225, %s226
      %s228 = smul.addr %s227, 8
      %s229 = scalar_lea.vmem %s1, %s228
      %p230 = pneg %p76
      %p231 = pneg %p73
      %s232 = smul.u32 2, %s20
      %p233 = scmp.lt.s32.totalorder %s19, 1
      %s234 = scalar_select %p233, %s19, 1
      %p235 = scmp.lt.s32.totalorder %s232, 7
      %s236 = scalar_select %p235, %s232, 7
      %s237 = smul.addr %s234, 8
      %s238 = sadd.s32 %s236, %s237
      %s239 = smul.addr %s238, 4
      %s240 = scalar_lea.vmem %s2, %s239
      %p241 = pneg %p104
      %p242 = pneg %p101
      %p243 = pneg %p125
      %p244 = pneg %p122
      %p245 = pneg %p153
      %p246 = pneg %p150
      %s247 = smul.u32 2, %s20
      %p248 = scmp.lt.s32.totalorder %s19, 1
      %s249 = scalar_select %p248, %s19, 1
      %p250 = scmp.lt.s32.totalorder %s247, 7
      %s251 = scalar_select %p250, %s247, 7
      %s252 = smul.addr %s249, 8
      %s253 = sadd.s32 %s251, %s252
      %s254 = smul.addr %s253, 4
      %s255 = scalar_lea.vmem %s4, %s254
      %p256 = scmp.lt.s32.totalorder %s19, 1
      %s257 = scalar_select %p256, %s19, 1
      %s258 = smul.addr %s257, 4
      %s259 = scalar_lea.vmem %s0, %s258
      %s260 = smul.u32 2, %s20
      %p261 = scmp.lt.s32.totalorder %s19, 1
      %s262 = scalar_select %p261, %s19, 1
      %p263 = scmp.lt.s32.totalorder %s260, 7
      %s264 = scalar_select %p263, %s260, 7
      %s265 = smul.addr %s262, 8
      %s266 = sadd.s32 %s264, %s265
      %s267 = smul.addr %s266, 8
      %s268 = scalar_lea.vmem %s1, %s267
      %s269 = smul.u32 2, %s20
      %s270 = smul.u32 2, %s20
      %p271 = scmp.lt.s32.totalorder %s19, 1
      %s272 = scalar_select %p271, %s19, 1
      %p273 = scmp.lt.s32.totalorder %s270, 7
      %s274 = scalar_select %p273, %s270, 7
      %s275 = smul.addr %s272, 8
      %s276 = sadd.s32 %s274, %s275
      %s277 = smul.addr %s276, 4
      %s278 = scalar_lea.vmem %s2, %s277
      %s279 = smul.u32 2, %s20
      %s280 = smul.u32 2, %s20
      %p281 = scmp.lt.s32.totalorder %s19, 1
      %s282 = scalar_select %p281, %s19, 1
      %p283 = scmp.lt.s32.totalorder %s280, 7
      %s284 = scalar_select %p283, %s280, 7
      %s285 = smul.addr %s282, 8
      %s286 = sadd.s32 %s284, %s285
      %s287 = smul.addr %s286, 4
      %s288 = scalar_lea.vmem %s4, %s287
      %s289 = smul.u32 2, %s20
      %v290 = vld [vmem:[%s259] sm:$0x7]
      %v291 = vld [vmem:[%s268] sm:$0xff]
      %v292 = vld [vmem:[%s268 + $0x8] sm:$0xff]
      %v293 = vld [vmem:[%s3] sm:$0x7]
      %295 = vset.pattern.permute.xlu0 0
      %296 = vperm.xlu0 %295, %v293
      %v297 = vpop.permute.xlu0 %296
      %vm299 = vcmask 64512
      %v301 = vsel %vm299, %v290, 0
      %303 = vmatprep.subr.mxu0 %v292
      %304 = vmatpush1.msra.mxu0 %v291
      %305 = vmatprep.subr.mxu0 0.0
      %306 = vmatpush1.msra.mxu0 0.0
      %307 = vmatprep.subr.mxu0 0.0
      %308 = vmatpush1.msra.mxu0 0.0
      %309 = vmatprep.subr.mxu0 0.0
      %310 = vmatpush1.msra.mxu0 0.0
      %311 = vmatprep.subr.mxu0 0.0
      %312 = vmatpush1.msra.mxu0 0.0
      %313 = vmatprep.subr.mxu0 0.0
      %314 = vmatpush1.msra.mxu0 0.0
      %315 = vmatprep.subr.mxu0 0.0
      %316 = vmatpush1.msra.mxu0 0.0
      %317 = vmatprep.subr.mxu0 0.0
      %318 = vmatpush1.msra.mxu0 0.0
      %319 = vmatprep.subr.mxu0 0.0
      %320 = vmatpush1.msra.mxu0 0.0
      %321 = vmatprep.subr.mxu0 0.0
      %322 = vmatpush1.msra.mxu0 0.0
      %323 = vmatprep.subr.mxu0 0.0
      %324 = vmatpush1.msra.mxu0 0.0
      %325 = vmatprep.subr.mxu0 0.0
      %326 = vmatpush1.msra.mxu0 0.0
      %327 = vmatprep.subr.mxu0 0.0
      %328 = vmatpush1.msra.mxu0 0.0
      %329 = vmatprep.subr.mxu0 0.0
      %330 = vmatpush1.msra.mxu0 0.0
      %331 = vmatprep.subr.mxu0 0.0
      %332 = vmatpush1.msra.mxu0 0.0
      %333 = vmatprep.subr.mxu0 0.0
      %334 = vmatpush1.msra.mxu0 0.0
      %335 = vmatprep.subr.mxu0 0.0
      %336 = vmatpush1.msra.mxu0 0.0
      %337 = vmatprep.subr.mxu0 0.0
      %338 = vmatpush1.msra.mxu0 0.0
      %339 = vmatprep.subr.mxu0 0.0
      %340 = vmatpush1.msra.mxu0 0.0
      %341 = vmatprep.subr.mxu0 0.0
      %342 = vmatpush1.msra.mxu0 0.0
      %343 = vmatprep.subr.mxu0 0.0
      %344 = vmatpush1.msra.mxu0 0.0
      %345 = vmatprep.subr.mxu0 0.0
      %346 = vmatpush1.msra.mxu0 0.0
      %347 = vmatprep.subr.mxu0 0.0
      %348 = vmatpush1.msra.mxu0 0.0
      %349 = vmatprep.subr.mxu0 0.0
      %350 = vmatpush1.msra.mxu0 0.0
      %351 = vmatprep.subr.mxu0 0.0
      %352 = vmatpush1.msra.mxu0 0.0
      %353 = vmatprep.subr.mxu0 0.0
      %354 = vmatpush1.msra.mxu0 0.0
      %355 = vmatprep.subr.mxu0 0.0
      %356 = vmatpush1.msra.mxu0 0.0
      %357 = vmatprep.subr.mxu0 0.0
      %358 = vmatpush1.msra.mxu0 0.0
      %359 = vmatprep.subr.mxu0 0.0
      %360 = vmatpush1.msra.mxu0 0.0
      %361 = vmatprep.subr.mxu0 0.0
      %362 = vmatpush1.msra.mxu0 0.0
      %363 = vmatprep.subr.mxu0 0.0
      %364 = vmatpush1.msra.mxu0 0.0
      %365 = vmatprep.subr.mxu0 0.0
      %366 = vmatpush1.msra.mxu0 0.0
      %367 = vmatprep.mubr.f32.mxu0 0.0
      %368 = vmatmul.mubr.f32.gmra.mrb[0].mxu0 %v301
      %v369 = vpop.f32.mrb[0].mxu0
      %v370 = vadd.f32 %v297, %v369
      %v371 = vpop.f32.mrb[0].mxu0
      %v372 = vadd.f32 %v297, %v371
      %373 = vdwg.mxu0
      %v374 = vld [vmem:[%s278] sm:$0x77]
      %v376 = vcombine.high %v374, %v374
      %v378 = vadd.f32 %v370, %v374
      %v379 = vadd.f32 %v372, %v376
      %v382 = vcombine.low %v378, %v379
      %384 = vst [vmem:[%s288] sm:$0x77] %v382
      %s385 = smul.u32 2, %s20
      %p386 = scmp.lt.s32.totalorder %s19, 1
      %s387 = scalar_select %p386, %s19, 1
      %p388 = scmp.lt.s32.totalorder %s385, 7
      %s389 = scalar_select %p388, %s385, 7
      %s390 = smul.addr %s387, 8
      %s391 = sadd.s32 %s389, %s390
      %s392 = smul.addr %s391, 4
      %s393 = scalar_lea.vmem %s4, %s392
      // Predicated region
      $region37: #{tpu_custom_call.1} parent=35 // pred_check
        %p394 = pneg %p150
      $region38: #{tpu_custom_call.1} parent=35 // pred_check_branch
        %396 = sbr.rel (%p394) target = $region40
      $region39: #{tpu_custom_call.1} parent=35 // pred_region
        %s397 = smul.u32 2, %s20
      $region40: #{tpu_custom_call.1} parent=35 // pred_fallthru
        _
    $region36: #{tpu_custom_call.1} parent=5 // pred_fallthru
      _
    %p398 = scmp.le.s32.totalorder 2, %s10
    // Predicated region
    $region41: #{tpu_custom_call.1} parent=5 // pred_check
      %p399 = pneg %p398
    $region42: #{tpu_custom_call.1} parent=5 // pred_check_branch
      %401 = sbr.rel (%p399) target = $region44
    $region43: #{tpu_custom_call.1} parent=5 // pred_region
      %s402 = ssub.s32 %s10, 2
      // Predicated region
      $region45: #{tpu_custom_call.1} parent=43 // pred_check
        %p403 = pneg %p156
      $region46: #{tpu_custom_call.1} parent=43 // pred_check_branch
        %405 = sbr.rel (%p403) target = $region48
      $region47: #{tpu_custom_call.1} parent=43 // pred_region
        %s406 = smul.u32 2, %s22
        %p407 = scmp.lt.s32.totalorder %s21, 1
        %s408 = scalar_select %p407, %s21, 1
        %p409 = scmp.lt.s32.totalorder %s406, 7
        %s410 = scalar_select %p409, %s406, 7
        %s411 = smul.addr %s408, 8
        %s412 = sadd.s32 %s410, %s411
        %s413 = smul.addr %s412, 4
        %s414 = scalar_lea.vmem %s4, %s413
      $region48: #{tpu_custom_call.1} parent=43 // pred_fallthru
        _
    $region44: #{tpu_custom_call.1} parent=5 // pred_fallthru
      _
  $region6: #{tpu_custom_call.1} parent=0 // loop_footer
    %s14 = sadd.s32 1, %s10
  $region7: #{tpu_custom_call.1} parent=0 // loop_footer_branch
    %9 = sbr.rel target = $region3
  $region8: #{tpu_custom_call.1} parent=0 // loop_exit
    _

</llo_original>
